<compile_context>
chip_gen: v6e
topology: v6e:2x2x1
jax: 0.10.0
libtpu: 0.0.40
codegen_flags: <defaults>
</compile_context>

<pallas_src>
import functools

import jax
import jax.numpy as jnp
from jax.experimental import pallas as pl
from jax.experimental.pallas import tpu as pltpu  # noqa: F401  (TPU backend)

EPS = 1e-5
LANE = 128      # all E-wide / class-wide dims are lane-padded to 128
BOX_PAD = 8     # bbox feature dim padded to one full sublane group


# ----------------------------------------------------------------------------
# Pallas kernel: fused (GAP-folded) backbone + BN-folded MLP head
# ----------------------------------------------------------------------------
def _vrd_kernel(img_ref, box_ref, w_ref, b_ref, out_ref):
    """Inputs:
      img_ref : [B, C*H*W]              flat image; GAP + 1/HW folded into weights
      box_ref : [B, 8]                  bboxes zero-padded to a full sublane group
      w_ref   : [C*H*W + 8 + 3*128, 128] packed weight slab, 8-aligned offsets:
                  rows [0, K)        image projection (GAP-folded)
                  rows [K, K+8)      bbox projection (4 real + 4 zero rows)
                  rows [.., +128)    fc1
                  rows [.., +128)    fc2 with BN1 folded into its rows
                  rows [.., +128)    final_fc with BN2 folded, zero-padded lanes
      b_ref   : [8, 128]               bias slab rows = [proj_b, b1, b2', bf', 0..]
      out_ref : [B, 128]               lane-dense padded output
    """
    k_img = img_ref.shape[1]
    epad = out_ref.shape[1]

    o0 = k_img                  # bbox projection offset   (multiple of 8)
    o1 = o0 + BOX_PAD           # fc1 offset
    o2 = o1 + epad              # fc2 offset
    o3 = o2 + epad              # final_fc offset

    b = b_ref[...]              # (8, 128), one load; static row slices below

    # --- synthetic frozen backbone: (GAP+concat+linear) folded into one slab ---
    # TODO(synk): the real backbone is an arbitrary frozen torch module; this is
    # a deterministic synthetic stand-in fused into the kernel.
    emb = (jnp.dot(img_ref[...], w_ref[0:o0, :],
                   preferred_element_type=jnp.float32)
           + jnp.dot(box_ref[...], w_ref[o0:o1, :],
                     preferred_element_type=jnp.float32)
           + b[0:1, :])

    # --- head: FC1 -> ReLU -> [BN1 folded] -> FC2 -> ReLU -> [BN2 folded]
    #           -> final_fc -> ReLU ------------------------------------------
    h1 = jnp.maximum(
        jnp.dot(emb, w_ref[o1:o2, :], preferred_element_type=jnp.float32)
        + b[1:2, :], 0.0)
    h2 = jnp.maximum(
        jnp.dot(h1, w_ref[o2:o3, :], preferred_element_type=jnp.float32)
        + b[2:3, :], 0.0)
    out = jnp.maximum(
        jnp.dot(h2, w_ref[o3:o3 + epad, :], preferred_element_type=jnp.float32)
        + b[3:4, :], 0.0)

    out_ref[...] = out.astype(out_ref.dtype)   # full (B, 128) unmasked store


# ----------------------------------------------------------------------------
# Trace-time folding: GAP -> projection weight, BN -> adjacent Linear,
# lane padding to 128, packing into one weight slab + one bias slab.
# ----------------------------------------------------------------------------
def fold_params(head, backbone, c_img, hw, n_pad=LANE):
    E = head["w1"].shape[0]
    C = head["wf"].shape[1]

    # BN1 folded into fc2:  x1 = s1*h1 + sh1  =>  x1@w2+b2 = h1@(s1^T*w2) + (sh1@w2+b2)
    s1 = head["g1"] * jax.lax.rsqrt(head["v1"] + EPS)        # (1, E)
    sh1 = head["be1"] - head["m1"] * s1
    w2p = head["w2"] * s1.T
    b2p = sh1 @ head["w2"] + head["b2"]

    # BN2 folded into final_fc
    s2 = head["g2"] * jax.lax.rsqrt(head["v2"] + EPS)
    sh2 = head["be2"] - head["m2"] * s2
    wfp = head["wf"] * s2.T                                  # (E, C)
    bfp = sh2 @ head["wf"] + head["bf"]                      # (1, C)

    pw = backbone["proj_w"]                                  # (c_img + 4, E)
    # GAP + 1/HW folded into the image-projection rows: row (c*HW + hw) = pw[c]/HW.
    w_img = jnp.repeat(pw[:c_img, :] / float(hw), hw, axis=0)   # (c_img*HW, E)
    w_box = pw[c_img:, :]                                        # (4, E)

    # Lane padding E -> 128; zero lanes/rows stay zero through bias+ReLU.
    w_img_p = jnp.zeros((c_img * hw, n_pad), jnp.float32).at[:, :E].set(w_img)
    w_box_p = jnp.zeros((BOX_PAD, n_pad), jnp.float32).at[:4, :E].set(w_box)
    w1_p = jnp.zeros((n_pad, n_pad), jnp.float32).at[:E, :E].set(head["w1"])
    w2_p = jnp.zeros((n_pad, n_pad), jnp.float32).at[:E, :E].set(w2p)
    wf_p = jnp.zeros((n_pad, n_pad), jnp.float32).at[:E, :C].set(wfp)

    # One weight slab; every sub-block starts at a multiple of 8 sublanes.
    w_slab = jnp.concatenate([w_img_p, w_box_p, w1_p, w2_p, wf_p], axis=0)

    # One (8,128) bias slab: rows = [proj_b, b1, b2_folded, bf_folded, 0, 0, 0, 0].
    b_slab = jnp.zeros((8, n_pad), jnp.float32)
    b_slab = b_slab.at[0, :E].set(backbone["proj_b"][0])
    b_slab = b_slab.at[1, :E].set(head["b1"][0])
    b_slab = b_slab.at[2, :E].set(b2p[0])
    b_slab = b_slab.at[3, :C].set(bfp[0])

    return dict(w=w_slab, b=b_slab)


# ----------------------------------------------------------------------------
# Forward wrapper (single jit, single pallas_call)
# ----------------------------------------------------------------------------
@functools.partial(jax.jit, static_argnames=("n_classes",))
def vrd_forward(image, bboxes, folded, n_classes):
    B, C_img, H, W = image.shape
    k_img = C_img * H * W

    img_flat = image.reshape(B, k_img)                 # contiguous -> free
    box_pad = jnp.zeros((B, BOX_PAD), jnp.float32).at[:, :bboxes.shape[1]].set(bboxes)

    flops = 2 * B * (k_img * LANE + BOX_PAD * LANE + 3 * LANE * LANE)
    bytes_accessed = 4 * (B * k_img + B * BOX_PAD
                          + folded["w"].size + folded["b"].size + B * LANE)

    out_pad = pl.pallas_call(
        _vrd_kernel,
        # Empty grid, default BlockSpecs: every operand is one full-array block
        # resident in VMEM (~0.8 MB total -> fits all generations trivially).
        out_shape=jax.ShapeDtypeStruct((B, LANE), jnp.float32),
        cost_estimate=pl.CostEstimate(flops=flops, transcendentals=0,
                                      bytes_accessed=bytes_accessed),
    )(img_flat, box_pad, folded["w"], folded["b"])

    return out_pad[:, :n_classes]


# ----------------------------------------------------------------------------
# Parameter init + pure-JAX reference (original, unfolded math)
# ----------------------------------------------------------------------------
def init_params(key, in_feat, embedding_size, n_classes):
    ks = jax.random.split(key, 8)
    E, C = embedding_size, n_classes
    scale = 0.1

    def lin(k, din, dout):
        kw, kb = jax.random.split(k)
        w = scale * jax.random.normal(kw, (din, dout), jnp.float32)
        b = scale * jax.random.normal(kb, (1, dout), jnp.float32)
        return w, b

    w1, b1 = lin(ks[0], E, E)
    w2, b2 = lin(ks[1], E, E)
    wf, bf = lin(ks[2], E, C)
    proj_w, proj_b = lin(ks[3], in_feat, E)

    def bn(k):
        k1, k2, k3 = jax.random.split(k, 3)
        gamma = 1.0 + 0.1 * jax.random.normal(k1, (1, E), jnp.float32)
        beta = 0.1 * jax.random.normal(k2, (1, E), jnp.float32)
        mean = 0.1 * jax.random.normal(k3, (1, E), jnp.float32)
        var = jnp.full((1, E), 0.9, jnp.float32)
        return gamma, beta, mean, var

    g1, be1, m1, v1 = bn(ks[4])
    g2, be2, m2, v2 = bn(ks[5])

    head = dict(w1=w1, b1=b1, g1=g1, be1=be1, m1=m1, v1=v1,
                w2=w2, b2=b2, g2=g2, be2=be2, m2=m2, v2=v2,
                wf=wf, bf=bf)
    backbone = dict(proj_w=proj_w, proj_b=proj_b)
    return head, backbone


def reference_forward(image, bboxes, head, backbone):
    """Pure-JAX reference implementing the ORIGINAL (unfolded) module math."""
    pooled = jnp.mean(image, axis=(2, 3))
    feat = jnp.concatenate([pooled, bboxes], axis=-1)
    emb = feat @ backbone["proj_w"] + backbone["proj_b"]

    h1 = jnp.maximum(emb @ head["w1"] + head["b1"], 0.0)
    x1 = (h1 - head["m1"]) / jnp.sqrt(head["v1"] + EPS) * head["g1"] + head["be1"]
    h2 = jnp.maximum(x1 @ head["w2"] + head["b2"], 0.0)
    x2 = (h2 - head["m2"]) / jnp.sqrt(head["v2"] + EPS) * head["g2"] + head["be2"]
    return jnp.maximum(x2 @ head["wf"] + head["bf"], 0.0)


if __name__ == "__main__":
    B, C_IMG, H, W = 8, 4, 16, 16
    EMB, N_CLASSES = 32, 9

    key = jax.random.PRNGKey(0)
    k_img, k_box, k_par = jax.random.split(key, 3)

    image = jax.random.normal(k_img, (B, C_IMG, H, W), jnp.float32)   # NCHW
    bboxes = jax.random.uniform(k_box, (B, 4), jnp.float32)

    head_params, backbone_params = init_params(k_par, C_IMG + 4, EMB, N_CLASSES)
    folded = fold_params(head_params, backbone_params, c_img=C_IMG, hw=H * W)

    out = vrd_forward(image, bboxes, folded, n_classes=N_CLASSES)
    out = jax.block_until_ready(out)

    ref = reference_forward(image, bboxes, head_params, backbone_params)
    assert out.shape == (B, N_CLASSES), out.shape
    assert jnp.allclose(out, ref, atol=1e-4, rtol=1e-4), "mismatch vs reference"

    print("KERNEL_OK")
</pallas_src>

<mosaic_0001>
module attributes {stable_mosaic.version = 11 : i64} {
  func.func @_vrd_kernel(%arg0: memref<8x1024xf32, #tpu.memory_space<vmem>>, %arg1: memref<8x8xf32, #tpu.memory_space<vmem>>, %arg2: memref<1416x128xf32, #tpu.memory_space<vmem>>, %arg3: memref<8x128xf32, #tpu.memory_space<vmem>>, %arg4: memref<8x128xf32, #tpu.memory_space<vmem>>) attributes {dimension_semantics = [], scalar_prefetch = 0 : i64, scratch_operands = 0 : i64, tpu.core_type = #tpu.core_type<tc>} {
    %c0 = arith.constant 0 : index
    %c0_0 = arith.constant 0 : index
    %0 = vector.load %arg3[%c0, %c0_0] : memref<8x128xf32, #tpu.memory_space<vmem>>, vector<8x128xf32>
    %c0_1 = arith.constant 0 : index
    %c0_2 = arith.constant 0 : index
    %1 = vector.load %arg0[%c0_1, %c0_2] : memref<8x1024xf32, #tpu.memory_space<vmem>>, vector<8x1024xf32>
    %c0_3 = arith.constant 0 : index
    %c0_4 = arith.constant 0 : index
    %2 = vector.load %arg2[%c0_3, %c0_4] : memref<1416x128xf32, #tpu.memory_space<vmem>>, vector<1024x128xf32>
    %cst = arith.constant dense<0.000000e+00> : vector<8x128xf32>
    %3 = tpu.matmul %1, %2, %cst {dimension_numbers = #tpu.dot_dimension_numbers<[1], [0], [0], [1], [0, 0, 1, 1], [], []>} : vector<8x1024xf32>, vector<1024x128xf32>, vector<8x128xf32> -> vector<8x128xf32>
    %c0_5 = arith.constant 0 : index
    %c0_6 = arith.constant 0 : index
    %4 = vector.load %arg1[%c0_5, %c0_6] : memref<8x8xf32, #tpu.memory_space<vmem>>, vector<8x8xf32>
    %c1024 = arith.constant 1024 : index
    %c0_7 = arith.constant 0 : index
    %5 = vector.load %arg2[%c1024, %c0_7] : memref<1416x128xf32, #tpu.memory_space<vmem>>, vector<8x128xf32>
    %cst_8 = arith.constant dense<0.000000e+00> : vector<8x128xf32>
    %6 = tpu.matmul %4, %5, %cst_8 {dimension_numbers = #tpu.dot_dimension_numbers<[1], [0], [0], [1], [0, 0, 1, 1], [], []>} : vector<8x8xf32>, vector<8x128xf32>, vector<8x128xf32> -> vector<8x128xf32>
    %7 = arith.addf %3, %6 : vector<8x128xf32>
    %8 = vector.extract_strided_slice %0 {offsets = [0, 0], sizes = [1, 128], strides = [1, 1]} : vector<8x128xf32> to vector<1x128xf32>
    %9 = vector.broadcast %8 : vector<1x128xf32> to vector<8x128xf32>
    %10 = arith.addf %7, %9 : vector<8x128xf32>
    %c1032 = arith.constant 1032 : index
    %c0_9 = arith.constant 0 : index
    %11 = vector.load %arg2[%c1032, %c0_9] : memref<1416x128xf32, #tpu.memory_space<vmem>>, vector<128x128xf32>
    %cst_10 = arith.constant dense<0.000000e+00> : vector<8x128xf32>
    %12 = tpu.matmul %10, %11, %cst_10 {dimension_numbers = #tpu.dot_dimension_numbers<[1], [0], [0], [1], [0, 0, 1, 1], [], []>} : vector<8x128xf32>, vector<128x128xf32>, vector<8x128xf32> -> vector<8x128xf32>
    %13 = vector.extract_strided_slice %0 {offsets = [1, 0], sizes = [1, 128], strides = [1, 1]} : vector<8x128xf32> to vector<1x128xf32>
    %14 = vector.broadcast %13 : vector<1x128xf32> to vector<8x128xf32>
    %15 = arith.addf %12, %14 : vector<8x128xf32>
    %cst_11 = arith.constant 0.000000e+00 : f32
    %16 = vector.broadcast %cst_11 : f32 to vector<8x128xf32>
    %17 = arith.maximumf %15, %16 : vector<8x128xf32>
    %c1160 = arith.constant 1160 : index
    %c0_12 = arith.constant 0 : index
    %18 = vector.load %arg2[%c1160, %c0_12] : memref<1416x128xf32, #tpu.memory_space<vmem>>, vector<128x128xf32>
    %cst_13 = arith.constant dense<0.000000e+00> : vector<8x128xf32>
    %19 = tpu.matmul %17, %18, %cst_13 {dimension_numbers = #tpu.dot_dimension_numbers<[1], [0], [0], [1], [0, 0, 1, 1], [], []>} : vector<8x128xf32>, vector<128x128xf32>, vector<8x128xf32> -> vector<8x128xf32>
    %20 = vector.extract_strided_slice %0 {offsets = [2, 0], sizes = [1, 128], strides = [1, 1]} : vector<8x128xf32> to vector<1x128xf32>
    %21 = vector.broadcast %20 : vector<1x128xf32> to vector<8x128xf32>
    %22 = arith.addf %19, %21 : vector<8x128xf32>
    %cst_14 = arith.constant 0.000000e+00 : f32
    %23 = vector.broadcast %cst_14 : f32 to vector<8x128xf32>
    %24 = arith.maximumf %22, %23 : vector<8x128xf32>
    %c1288 = arith.constant 1288 : index
    %c0_15 = arith.constant 0 : index
    %25 = vector.load %arg2[%c1288, %c0_15] : memref<1416x128xf32, #tpu.memory_space<vmem>>, vector<128x128xf32>
    %cst_16 = arith.constant dense<0.000000e+00> : vector<8x128xf32>
    %26 = tpu.matmul %24, %25, %cst_16 {dimension_numbers = #tpu.dot_dimension_numbers<[1], [0], [0], [1], [0, 0, 1, 1], [], []>} : vector<8x128xf32>, vector<128x128xf32>, vector<8x128xf32> -> vector<8x128xf32>
    %27 = vector.extract_strided_slice %0 {offsets = [3, 0], sizes = [1, 128], strides = [1, 1]} : vector<8x128xf32> to vector<1x128xf32>
    %28 = vector.broadcast %27 : vector<1x128xf32> to vector<8x128xf32>
    %29 = arith.addf %26, %28 : vector<8x128xf32>
    %cst_17 = arith.constant 0.000000e+00 : f32
    %30 = vector.broadcast %cst_17 : f32 to vector<8x128xf32>
    %31 = arith.maximumf %29, %30 : vector<8x128xf32>
    %c0_18 = arith.constant 0 : index
    %c0_19 = arith.constant 0 : index
    %32 = vector.load %arg4[%c0_18, %c0_19] : memref<8x128xf32, #tpu.memory_space<vmem>>, vector<8x128xf32>
    tpu.vector_store %arg4[%c0_18, %c0_19], %31 {strides = array<i32>} : memref<8x128xf32, #tpu.memory_space<vmem>>, vector<8x128xf32>,
    return
  }
}

</mosaic_0001>

<llo_original>
// kernel: vrd_forward.1
$region0: #{vrd_forward.1}
  #allocation0 [shape = 'u32[]', space=smem, size = 0x4, offset = 0x4, fixed_abs, tag = 'smem constant byte address 0x4 - core index']
  #allocation1 [shape = 'u32[144,128]{1,0:T(1,128)}', space=vmem, size = 0x12000, scoped, tag = 'internal scratch']
  %s0 = inlined_call_operand.vmem [shape: f32[8,1024], index: 0, kind: input, shape index: {}]
  %s1 = inlined_call_operand.vmem [shape: f32[8,8], index: 1, kind: input, shape index: {}]
  %s2 = inlined_call_operand.hbm [shape: f32[1416,128], index: 2, kind: input, shape index: {}]
  %s3 = inlined_call_operand.vmem [shape: f32[8,128], index: 3, kind: input, shape index: {}]
  %s4 = inlined_call_operand.hbm [shape: f32[8,128], index: 4, kind: output, shape index: {}]
  %s5 = sld [smem:[#allocation0]]
  $region30: #{vrd_forward.1} parent=0
    _
  %s7 = ssub.s32 1, %s5
  %s8 = scalar_select 0, %s7, %s5
  $region1: #{vrd_forward.1} parent=0
    #allocation2 [shape = 'u8[724992]{0}', space=vmem, size = 0xb1000, scoped, tag = 'input window, operand 2, single buffered']
    #allocation3 [shape = 's32[1]{0}', space=sflag, size = 0x4, scoped, tag = 'scoped memory for vrd_forward.1']
    #allocation4 [shape = 's32[1]{0}', space=sflag, size = 0x4, scoped, tag = 'scoped memory for vrd_forward.1']
    #allocation5 [shape = 'u8[4096]{0}', space=vmem, size = 0x1000, scoped, tag = 'output window, operand 0, single buffered']
    %9 = vsyncpa [#allocation3], 0
    %10 = vsyncpa [#allocation4], 0
    // Predicated region
    $region2: #{vrd_forward.1} parent=1 // pred_check
      _
    $region3: #{vrd_forward.1} parent=1 // pred_check_branch
      %12 = sbr.rel (0) target = $region5
    $region4: #{vrd_forward.1} parent=1 // pred_region
      _
    $region5: #{vrd_forward.1} parent=1 // pred_fallthru
      _
    // Predicated region
    $region6: #{vrd_forward.1} parent=1 // pred_check
      _
    $region7: #{vrd_forward.1} parent=1 // pred_check_branch
      %14 = sbr.rel (0) target = $region9
    $region8: #{vrd_forward.1} parent=1 // pred_region
      _
    $region9: #{vrd_forward.1} parent=1 // pred_fallthru
      _
    // Predicated region
    $region10: #{vrd_forward.1} parent=1 // pred_check
      _
    $region11: #{vrd_forward.1} parent=1 // pred_check_branch
      %16 = sbr.rel (0) target = $region13
    $region12: #{vrd_forward.1} parent=1 // pred_region
      %s18 = ssub.s32 22656, 22656
      %19 = vsyncadd [#allocation3], %s18
      %s20 = sshll.u32 [#allocation2], 4
      %s21 = int_to_ptr.vmem [resolvable:$true] %s20
      %26 = dma.hbm_to_vmem [thread:$0]  %s2, 22656, %s21, [#allocation3], 128, 128, 8
    $region13: #{vrd_forward.1} parent=1 // pred_fallthru
      _
    // Predicated region
    $region14: #{vrd_forward.1} parent=1 // pred_check
      _
    $region15: #{vrd_forward.1} parent=1 // pred_check_branch
      %28 = sbr.rel (0) target = $region17
    $region16: #{vrd_forward.1} parent=1 // pred_region
      _
    $region17: #{vrd_forward.1} parent=1 // pred_fallthru
      _
    // Predicated region
    $region18: #{vrd_forward.1} parent=1 // pred_check
      _
    $region19: #{vrd_forward.1} parent=1 // pred_check_branch
      %30 = sbr.rel (0) target = $region21
    $region20: #{vrd_forward.1} parent=1 // pred_region
      %31 = dma.done [#allocation3], 22656
    $region21: #{vrd_forward.1} parent=1 // pred_fallthru
      _
    %v32 = vld [vmem:[%s3] sm:$0xff]
    %v33 = vld [vmem:[%s0] sm:$0xff]
    %v34 = vld [vmem:[%s0 + $0x8] sm:$0xff]
    %v35 = vld [vmem:[%s0 + $0x10] sm:$0xff]
    %v36 = vld [vmem:[%s0 + $0x18] sm:$0xff]
    %v37 = vld [vmem:[%s0 + $0x20] sm:$0xff]
    %v38 = vld [vmem:[%s0 + $0x28] sm:$0xff]
    %v39 = vld [vmem:[%s0 + $0x30] sm:$0xff]
    %v40 = vld [vmem:[%s0 + $0x38] sm:$0xff]
    %v41 = vld [vmem:[#allocation2] sm:$0xff]
    %v42 = vld [vmem:[#allocation2 + $0x8] sm:$0xff]
    %v43 = vld [vmem:[#allocation2 + $0x10] sm:$0xff]
    %v44 = vld [vmem:[#allocation2 + $0x18] sm:$0xff]
    %v45 = vld [vmem:[#allocation2 + $0x20] sm:$0xff]
    %v46 = vld [vmem:[#allocation2 + $0x28] sm:$0xff]
    %v47 = vld [vmem:[#allocation2 + $0x30] sm:$0xff]
    %v48 = vld [vmem:[#allocation2 + $0x38] sm:$0xff]
    %v49 = vld [vmem:[#allocation2 + $0x40] sm:$0xff]
    %v50 = vld [vmem:[#allocation2 + $0x48] sm:$0xff]
    %v51 = vld [vmem:[#allocation2 + $0x50] sm:$0xff]
    %v52 = vld [vmem:[#allocation2 + $0x58] sm:$0xff]
    %v53 = vld [vmem:[#allocation2 + $0x60] sm:$0xff]
    %v54 = vld [vmem:[#allocation2 + $0x68] sm:$0xff]
    %v55 = vld [vmem:[#allocation2 + $0x70] sm:$0xff]
    %v56 = vld [vmem:[#allocation2 + $0x78] sm:$0xff]
    %v57 = vld [vmem:[#allocation2 + $0x80] sm:$0xff]
    %v58 = vld [vmem:[#allocation2 + $0x88] sm:$0xff]
    %v59 = vld [vmem:[#allocation2 + $0x90] sm:$0xff]
    %v60 = vld [vmem:[#allocation2 + $0x98] sm:$0xff]
    %v61 = vld [vmem:[#allocation2 + $0xa0] sm:$0xff]
    %v62 = vld [vmem:[#allocation2 + $0xa8] sm:$0xff]
    %v63 = vld [vmem:[#allocation2 + $0xb0] sm:$0xff]
    %v64 = vld [vmem:[#allocation2 + $0xb8] sm:$0xff]
    %v65 = vld [vmem:[#allocation2 + $0xc0] sm:$0xff]
    %v66 = vld [vmem:[#allocation2 + $0xc8] sm:$0xff]
    %v67 = vld [vmem:[#allocation2 + $0xd0] sm:$0xff]
    %v68 = vld [vmem:[#allocation2 + $0xd8] sm:$0xff]
    %v69 = vld [vmem:[#allocation2 + $0xe0] sm:$0xff]
    %v70 = vld [vmem:[#allocation2 + $0xe8] sm:$0xff]
    %v71 = vld [vmem:[#allocation2 + $0xf0] sm:$0xff]
    %v72 = vld [vmem:[#allocation2 + $0xf8] sm:$0xff]
    %v73 = vld [vmem:[#allocation2 + $0x100] sm:$0xff]
    %v74 = vld [vmem:[#allocation2 + $0x108] sm:$0xff]
    %v75 = vld [vmem:[#allocation2 + $0x110] sm:$0xff]
    %v76 = vld [vmem:[#allocation2 + $0x118] sm:$0xff]
    %v77 = vld [vmem:[#allocation2 + $0x120] sm:$0xff]
    %v78 = vld [vmem:[#allocation2 + $0x128] sm:$0xff]
    %v79 = vld [vmem:[#allocation2 + $0x130] sm:$0xff]
    %v80 = vld [vmem:[#allocation2 + $0x138] sm:$0xff]
    %v81 = vld [vmem:[#allocation2 + $0x140] sm:$0xff]
    %v82 = vld [vmem:[#allocation2 + $0x148] sm:$0xff]
    %v83 = vld [vmem:[#allocation2 + $0x150] sm:$0xff]
    %v84 = vld [vmem:[#allocation2 + $0x158] sm:$0xff]
    %v85 = vld [vmem:[#allocation2 + $0x160] sm:$0xff]
    %v86 = vld [vmem:[#allocation2 + $0x168] sm:$0xff]
    %v87 = vld [vmem:[#allocation2 + $0x170] sm:$0xff]
    %v88 = vld [vmem:[#allocation2 + $0x178] sm:$0xff]
    %v89 = vld [vmem:[#allocation2 + $0x180] sm:$0xff]
    %v90 = vld [vmem:[#allocation2 + $0x188] sm:$0xff]
    %v91 = vld [vmem:[#allocation2 + $0x190] sm:$0xff]
    %v92 = vld [vmem:[#allocation2 + $0x198] sm:$0xff]
    %v93 = vld [vmem:[#allocation2 + $0x1a0] sm:$0xff]
    %v94 = vld [vmem:[#allocation2 + $0x1a8] sm:$0xff]
    %v95 = vld [vmem:[#allocation2 + $0x1b0] sm:$0xff]
    %v96 = vld [vmem:[#allocation2 + $0x1b8] sm:$0xff]
    %v97 = vld [vmem:[#allocation2 + $0x1c0] sm:$0xff]
    %v98 = vld [vmem:[#allocation2 + $0x1c8] sm:$0xff]
    %v99 = vld [vmem:[#allocation2 + $0x1d0] sm:$0xff]
    %v100 = vld [vmem:[#allocation2 + $0x1d8] sm:$0xff]
    %v101 = vld [vmem:[#allocation2 + $0x1e0] sm:$0xff]
    %v102 = vld [vmem:[#allocation2 + $0x1e8] sm:$0xff]
    %v103 = vld [vmem:[#allocation2 + $0x1f0] sm:$0xff]
    %v104 = vld [vmem:[#allocation2 + $0x1f8] sm:$0xff]
    %v105 = vld [vmem:[#allocation2 + $0x200] sm:$0xff]
    %v106 = vld [vmem:[#allocation2 + $0x208] sm:$0xff]
    %v107 = vld [vmem:[#allocation2 + $0x210] sm:$0xff]
    %v108 = vld [vmem:[#allocation2 + $0x218] sm:$0xff]
    %v109 = vld [vmem:[#allocation2 + $0x220] sm:$0xff]
    %v110 = vld [vmem:[#allocation2 + $0x228] sm:$0xff]
    %v111 = vld [vmem:[#allocation2 + $0x230] sm:$0xff]
    %v112 = vld [vmem:[#allocation2 + $0x238] sm:$0xff]
    %v113 = vld [vmem:[#allocation2 + $0x240] sm:$0xff]
    %v114 = vld [vmem:[#allocation2 + $0x248] sm:$0xff]
    %v115 = vld [vmem:[#allocation2 + $0x250] sm:$0xff]
    %v116 = vld [vmem:[#allocation2 + $0x258] sm:$0xff]
    %v117 = vld [vmem:[#allocation2 + $0x260] sm:$0xff]
    %v118 = vld [vmem:[#allocation2 + $0x268] sm:$0xff]
    %v119 = vld [vmem:[#allocation2 + $0x270] sm:$0xff]
    %v120 = vld [vmem:[#allocation2 + $0x278] sm:$0xff]
    %v121 = vld [vmem:[#allocation2 + $0x280] sm:$0xff]
    %v122 = vld [vmem:[#allocation2 + $0x288] sm:$0xff]
    %v123 = vld [vmem:[#allocation2 + $0x290] sm:$0xff]
    %v124 = vld [vmem:[#allocation2 + $0x298] sm:$0xff]
    %v125 = vld [vmem:[#allocation2 + $0x2a0] sm:$0xff]
    %v126 = vld [vmem:[#allocation2 + $0x2a8] sm:$0xff]
    %v127 = vld [vmem:[#allocation2 + $0x2b0] sm:$0xff]
    %v128 = vld [vmem:[#allocation2 + $0x2b8] sm:$0xff]
    %v129 = vld [vmem:[#allocation2 + $0x2c0] sm:$0xff]
    %v130 = vld [vmem:[#allocation2 + $0x2c8] sm:$0xff]
    %v131 = vld [vmem:[#allocation2 + $0x2d0] sm:$0xff]
    %v132 = vld [vmem:[#allocation2 + $0x2d8] sm:$0xff]
    %v133 = vld [vmem:[#allocation2 + $0x2e0] sm:$0xff]
    %v134 = vld [vmem:[#allocation2 + $0x2e8] sm:$0xff]
    %v135 = vld [vmem:[#allocation2 + $0x2f0] sm:$0xff]
    %v136 = vld [vmem:[#allocation2 + $0x2f8] sm:$0xff]
    %v137 = vld [vmem:[#allocation2 + $0x300] sm:$0xff]
    %v138 = vld [vmem:[#allocation2 + $0x308] sm:$0xff]
    %v139 = vld [vmem:[#allocation2 + $0x310] sm:$0xff]
    %v140 = vld [vmem:[#allocation2 + $0x318] sm:$0xff]
    %v141 = vld [vmem:[#allocation2 + $0x320] sm:$0xff]
    %v142 = vld [vmem:[#allocation2 + $0x328] sm:$0xff]
    %v143 = vld [vmem:[#allocation2 + $0x330] sm:$0xff]
    %v144 = vld [vmem:[#allocation2 + $0x338] sm:$0xff]
    %v145 = vld [vmem:[#allocation2 + $0x340] sm:$0xff]
    %v146 = vld [vmem:[#allocation2 + $0x348] sm:$0xff]
    %v147 = vld [vmem:[#allocation2 + $0x350] sm:$0xff]
    %v148 = vld [vmem:[#allocation2 + $0x358] sm:$0xff]
    %v149 = vld [vmem:[#allocation2 + $0x360] sm:$0xff]
    %v150 = vld [vmem:[#allocation2 + $0x368] sm:$0xff]
    %v151 = vld [vmem:[#allocation2 + $0x370] sm:$0xff]
    %v152 = vld [vmem:[#allocation2 + $0x378] sm:$0xff]
    %v153 = vld [vmem:[#allocation2 + $0x380] sm:$0xff]
    %v154 = vld [vmem:[#allocation2 + $0x388] sm:$0xff]
    %v155 = vld [vmem:[#allocation2 + $0x390] sm:$0xff]
    %v156 = vld [vmem:[#allocation2 + $0x398] sm:$0xff]
    %v157 = vld [vmem:[#allocation2 + $0x3a0] sm:$0xff]
    %v158 = vld [vmem:[#allocation2 + $0x3a8] sm:$0xff]
    %v159 = vld [vmem:[#allocation2 + $0x3b0] sm:$0xff]
    %v160 = vld [vmem:[#allocation2 + $0x3b8] sm:$0xff]
    %v161 = vld [vmem:[#allocation2 + $0x3c0] sm:$0xff]
    %v162 = vld [vmem:[#allocation2 + $0x3c8] sm:$0xff]
    %v163 = vld [vmem:[#allocation2 + $0x3d0] sm:$0xff]
    %v164 = vld [vmem:[#allocation2 + $0x3d8] sm:$0xff]
    %v165 = vld [vmem:[#allocation2 + $0x3e0] sm:$0xff]
    %v166 = vld [vmem:[#allocation2 + $0x3e8] sm:$0xff]
    %v167 = vld [vmem:[#allocation2 + $0x3f0] sm:$0xff]
    %v168 = vld [vmem:[#allocation2 + $0x3f8] sm:$0xff]
    %v169 = vld [vmem:[%s1] sm:$0xff]
    %v170 = vld [vmem:[#allocation2 + $0x400] sm:$0xff]
    %vm171 = vcmask 64512
    %v173 = vsel %vm171, %v169, 0
    %175 = vmatprep.subr.mxu0 0.0
    %176 = vmatpush1.msra.mxu0 0.0
    %177 = vmatprep.subr.mxu0 0.0
    %178 = vmatpush1.msra.mxu0 0.0
    %179 = vmatprep.subr.mxu0 0.0
    %180 = vmatpush1.msra.mxu0 0.0
    %181 = vmatprep.subr.mxu0 0.0
    %182 = vmatpush1.msra.mxu0 0.0
    %183 = vmatprep.subr.mxu0 0.0
    %184 = vmatpush1.msra.mxu0 0.0
    %185 = vmatprep.subr.mxu0 0.0
    %186 = vmatpush1.msra.mxu0 0.0
    %187 = vmatprep.subr.mxu0 0.0
    %188 = vmatpush1.msra.mxu0 0.0
    %189 = vmatprep.subr.mxu0 0.0
    %190 = vmatpush1.msra.mxu0 0.0
    %191 = vmatprep.subr.mxu0 0.0
    %192 = vmatpush1.msra.mxu0 0.0
    %193 = vmatprep.subr.mxu0 0.0
    %194 = vmatpush1.msra.mxu0 0.0
    %195 = vmatprep.subr.mxu0 0.0
    %196 = vmatpush1.msra.mxu0 0.0
    %197 = vmatprep.subr.mxu0 0.0
    %198 = vmatpush1.msra.mxu0 0.0
    %199 = vmatprep.subr.mxu0 0.0
    %200 = vmatpush1.msra.mxu0 0.0
    %201 = vmatprep.subr.mxu0 0.0
    %202 = vmatpush1.msra.mxu0 0.0
    %203 = vmatprep.subr.mxu0 0.0
    %204 = vmatpush1.msra.mxu0 0.0
    %205 = vmatprep.subr.mxu0 0.0
    %206 = vmatpush1.msra.mxu0 %v170
    %207 = vmatprep.subr.mxu0 0.0
    %208 = vmatpush2.msra.mxu0 0.0
    %209 = vmatprep.subr.mxu0 0.0
    %210 = vmatpush2.msra.mxu0 0.0
    %211 = vmatprep.subr.mxu0 0.0
    %212 = vmatpush2.msra.mxu0 0.0
    %213 = vmatprep.subr.mxu0 0.0
    %214 = vmatpush2.msra.mxu0 0.0
    %215 = vmatprep.subr.mxu0 0.0
    %216 = vmatpush2.msra.mxu0 0.0
    %217 = vmatprep.subr.mxu0 0.0
    %218 = vmatpush2.msra.mxu0 0.0
    %219 = vmatprep.subr.mxu0 0.0
    %220 = vmatpush2.msra.mxu0 0.0
    %221 = vmatprep.subr.mxu0 0.0
    %222 = vmatpush2.msra.mxu0 0.0
    %223 = vmatprep.subr.mxu0 0.0
    %224 = vmatpush2.msra.mxu0 0.0
    %225 = vmatprep.subr.mxu0 0.0
    %226 = vmatpush2.msra.mxu0 0.0
    %227 = vmatprep.subr.mxu0 0.0
    %228 = vmatpush2.msra.mxu0 0.0
    %229 = vmatprep.subr.mxu0 0.0
    %230 = vmatpush2.msra.mxu0 0.0
    %231 = vmatprep.subr.mxu0 0.0
    %232 = vmatpush2.msra.mxu0 0.0
    %233 = vmatprep.subr.mxu0 0.0
    %234 = vmatpush2.msra.mxu0 0.0
    %235 = vmatprep.subr.mxu0 0.0
    %236 = vmatpush2.msra.mxu0 0.0
    %237 = vmatprep.subr.mxu0 0.0
    %238 = vmatpush2.msra.mxu0 0.0
    %239 = vmatprep.mubr.f32.mxu0 0.0
    %240 = vmatmul.mubr.f32.gmra.mxu0 %v173
    %v241 = vpop.f32.mrf.mxu0
    %v242 = vadd.f32 0.0, %v241
    %v243 = vpop.f32.mrf.mxu0
    %244 = vdwg.mxu0
    %245 = vmatprep.subr.mxu0 0.0
    %246 = vmatpush1.msra.mxu0 %v56
    %247 = vmatprep.subr.mxu0 0.0
    %248 = vmatpush1.msra.mxu0 %v55
    %249 = vmatprep.subr.mxu0 0.0
    %250 = vmatpush1.msra.mxu0 %v54
    %251 = vmatprep.subr.mxu0 0.0
    %252 = vmatpush1.msra.mxu0 %v53
    %253 = vmatprep.subr.mxu0 0.0
    %254 = vmatpush1.msra.mxu0 %v52
    %255 = vmatprep.subr.mxu0 0.0
    %256 = vmatpush1.msra.mxu0 %v51
    %257 = vmatprep.subr.mxu0 0.0
    %258 = vmatpush1.msra.mxu0 %v50
    %259 = vmatprep.subr.mxu0 0.0
    %260 = vmatpush1.msra.mxu0 %v49
    %261 = vmatprep.subr.mxu0 0.0
    %262 = vmatpush1.msra.mxu0 %v48
    %263 = vmatprep.subr.mxu0 0.0
    %264 = vmatpush1.msra.mxu0 %v47
    %265 = vmatprep.subr.mxu0 0.0
    %266 = vmatpush1.msra.mxu0 %v46
    %267 = vmatprep.subr.mxu0 0.0
    %268 = vmatpush1.msra.mxu0 %v45
    %269 = vmatprep.subr.mxu0 0.0
    %270 = vmatpush1.msra.mxu0 %v44
    %271 = vmatprep.subr.mxu0 0.0
    %272 = vmatpush1.msra.mxu0 %v43
    %273 = vmatprep.subr.mxu0 0.0
    %274 = vmatpush1.msra.mxu0 %v42
    %275 = vmatprep.subr.mxu0 0.0
    %276 = vmatpush1.msra.mxu0 %v41
    %277 = vmatprep.subr.mxu0 0.0
    %278 = vmatpush2.msra.mxu0 %v72
    %279 = vmatprep.subr.mxu0 0.0
    %280 = vmatpush2.msra.mxu0 %v71
    %281 = vmatprep.subr.mxu0 0.0
    %282 = vmatpush2.msra.mxu0 %v70
    %283 = vmatprep.subr.mxu0 0.0
    %284 = vmatpush2.msra.mxu0 %v69
    %285 = vmatprep.subr.mxu0 0.0
    %286 = vmatpush2.msra.mxu0 %v68
    %287 = vmatprep.subr.mxu0 0.0
    %288 = vmatpush2.msra.mxu0 %v67
    %289 = vmatprep.subr.mxu0 0.0
    %290 = vmatpush2.msra.mxu0 %v66
    %291 = vmatprep.subr.mxu0 0.0
    %292 = vmatpush2.msra.mxu0 %v65
    %293 = vmatprep.subr.mxu0 0.0
    %294 = vmatpush2.msra.mxu0 %v64
    %295 = vmatprep.subr.mxu0 0.0
    %296 = vmatpush2.msra.mxu0 %v63
    %297 = vmatprep.subr.mxu0 0.0
    %298 = vmatpush2.msra.mxu0 %v62
    %299 = vmatprep.subr.mxu0 0.0
    %300 = vmatpush2.msra.mxu0 %v61
    %301 = vmatprep.subr.mxu0 0.0
    %302 = vmatpush2.msra.mxu0 %v60
    %303 = vmatprep.subr.mxu0 0.0
    %304 = vmatpush2.msra.mxu0 %v59
    %305 = vmatprep.subr.mxu0 0.0
    %306 = vmatpush2.msra.mxu0 %v58
    %307 = vmatprep.subr.mxu0 0.0
    %308 = vmatpush2.msra.mxu0 %v57
    %309 = vmatprep.mubr.f32.mxu0 %v34
    %310 = vmatmul.mubr.f32.gmra.mxu0 %v33
    %v311 = vpop.f32.mrf.mxu0
    %v312 = vadd.f32 %v242, %v311
    %v313 = vpop.f32.mrf.mxu0
    %314 = vdwg.mxu0
    %315 = vmatprep.subr.mxu0 0.0
    %316 = vmatpush1.msra.mxu0 %v88
    %317 = vmatprep.subr.mxu0 0.0
    %318 = vmatpush1.msra.mxu0 %v87
    %319 = vmatprep.subr.mxu0 0.0
    %320 = vmatpush1.msra.mxu0 %v86
    %321 = vmatprep.subr.mxu0 0.0
    %322 = vmatpush1.msra.mxu0 %v85
    %323 = vmatprep.subr.mxu0 0.0
    %324 = vmatpush1.msra.mxu0 %v84
    %325 = vmatprep.subr.mxu0 0.0
    %326 = vmatpush1.msra.mxu0 %v83
    %327 = vmatprep.subr.mxu0 0.0
    %328 = vmatpush1.msra.mxu0 %v82
    %329 = vmatprep.subr.mxu0 0.0
    %330 = vmatpush1.msra.mxu0 %v81
    %331 = vmatprep.subr.mxu0 0.0
    %332 = vmatpush1.msra.mxu0 %v80
    %333 = vmatprep.subr.mxu0 0.0
    %334 = vmatpush1.msra.mxu0 %v79
    %335 = vmatprep.subr.mxu0 0.0
    %336 = vmatpush1.msra.mxu0 %v78
    %337 = vmatprep.subr.mxu0 0.0
    %338 = vmatpush1.msra.mxu0 %v77
    %339 = vmatprep.subr.mxu0 0.0
    %340 = vmatpush1.msra.mxu0 %v76
    %341 = vmatprep.subr.mxu0 0.0
    %342 = vmatpush1.msra.mxu0 %v75
    %343 = vmatprep.subr.mxu0 0.0
    %344 = vmatpush1.msra.mxu0 %v74
    %345 = vmatprep.subr.mxu0 0.0
    %346 = vmatpush1.msra.mxu0 %v73
    %347 = vmatprep.subr.mxu0 0.0
    %348 = vmatpush2.msra.mxu0 %v104
    %349 = vmatprep.subr.mxu0 0.0
    %350 = vmatpush2.msra.mxu0 %v103
    %351 = vmatprep.subr.mxu0 0.0
    %352 = vmatpush2.msra.mxu0 %v102
    %353 = vmatprep.subr.mxu0 0.0
    %354 = vmatpush2.msra.mxu0 %v101
    %355 = vmatprep.subr.mxu0 0.0
    %356 = vmatpush2.msra.mxu0 %v100
    %357 = vmatprep.subr.mxu0 0.0
    %358 = vmatpush2.msra.mxu0 %v99
    %359 = vmatprep.subr.mxu0 0.0
    %360 = vmatpush2.msra.mxu0 %v98
    %361 = vmatprep.subr.mxu0 0.0
    %362 = vmatpush2.msra.mxu0 %v97
    %363 = vmatprep.subr.mxu0 0.0
    %364 = vmatpush2.msra.mxu0 %v96
    %365 = vmatprep.subr.mxu0 0.0
    %366 = vmatpush2.msra.mxu0 %v95
    %367 = vmatprep.subr.mxu0 0.0
    %368 = vmatpush2.msra.mxu0 %v94
    %369 = vmatprep.subr.mxu0 0.0
    %370 = vmatpush2.msra.mxu0 %v93
    %371 = vmatprep.subr.mxu0 0.0
    %372 = vmatpush2.msra.mxu0 %v92
    %373 = vmatprep.subr.mxu0 0.0
    %374 = vmatpush2.msra.mxu0 %v91
    %375 = vmatprep.subr.mxu0 0.0
    %376 = vmatpush2.msra.mxu0 %v90
    %377 = vmatprep.subr.mxu0 0.0
    %378 = vmatpush2.msra.mxu0 %v89
    %379 = vmatprep.mubr.f32.mxu0 %v36
    %380 = vmatmul.mubr.f32.gmra.mxu0 %v35
    %v381 = vpop.f32.mrf.mxu0
    %v382 = vadd.f32 %v312, %v381
    %v383 = vpop.f32.mrf.mxu0
    %384 = vdwg.mxu0
    %385 = vmatprep.subr.mxu0 0.0
    %386 = vmatpush1.msra.mxu0 %v120
    %387 = vmatprep.subr.mxu0 0.0
    %388 = vmatpush1.msra.mxu0 %v119
    %389 = vmatprep.subr.mxu0 0.0
    %390 = vmatpush1.msra.mxu0 %v118
    %391 = vmatprep.subr.mxu0 0.0
    %392 = vmatpush1.msra.mxu0 %v117
    %393 = vmatprep.subr.mxu0 0.0
    %394 = vmatpush1.msra.mxu0 %v116
    %395 = vmatprep.subr.mxu0 0.0
    %396 = vmatpush1.msra.mxu0 %v115
    %397 = vmatprep.subr.mxu0 0.0
    %398 = vmatpush1.msra.mxu0 %v114
    %399 = vmatprep.subr.mxu0 0.0
    %400 = vmatpush1.msra.mxu0 %v113
    %401 = vmatprep.subr.mxu0 0.0
    %402 = vmatpush1.msra.mxu0 %v112
    %403 = vmatprep.subr.mxu0 0.0
    %404 = vmatpush1.msra.mxu0 %v111
    %405 = vmatprep.subr.mxu0 0.0
    %406 = vmatpush1.msra.mxu0 %v110
    %407 = vmatprep.subr.mxu0 0.0
    %408 = vmatpush1.msra.mxu0 %v109
    %409 = vmatprep.subr.mxu0 0.0
    %410 = vmatpush1.msra.mxu0 %v108
    %411 = vmatprep.subr.mxu0 0.0
    %412 = vmatpush1.msra.mxu0 %v107
    %413 = vmatprep.subr.mxu0 0.0
    %414 = vmatpush1.msra.mxu0 %v106
    %415 = vmatprep.subr.mxu0 0.0
    %416 = vmatpush1.msra.mxu0 %v105
    %417 = vmatprep.subr.mxu0 0.0
    %418 = vmatpush2.msra.mxu0 %v136
    %419 = vmatprep.subr.mxu0 0.0
    %420 = vmatpush2.msra.mxu0 %v135
    %421 = vmatprep.subr.mxu0 0.0
    %422 = vmatpush2.msra.mxu0 %v134
    %423 = vmatprep.subr.mxu0 0.0
    %424 = vmatpush2.msra.mxu0 %v133
    %425 = vmatprep.subr.mxu0 0.0
    %426 = vmatpush2.msra.mxu0 %v132
    %427 = vmatprep.subr.mxu0 0.0
    %428 = vmatpush2.msra.mxu0 %v131
    %429 = vmatprep.subr.mxu0 0.0
    %430 = vmatpush2.msra.mxu0 %v130
    %431 = vmatprep.subr.mxu0 0.0
    %432 = vmatpush2.msra.mxu0 %v129
    %433 = vmatprep.subr.mxu0 0.0
    %434 = vmatpush2.msra.mxu0 %v128
    %435 = vmatprep.subr.mxu0 0.0
    %436 = vmatpush2.msra.mxu0 %v127
    %437 = vmatprep.subr.mxu0 0.0
    %438 = vmatpush2.msra.mxu0 %v126
    %439 = vmatprep.subr.mxu0 0.0
    %440 = vmatpush2.msra.mxu0 %v125
    %441 = vmatprep.subr.mxu0 0.0
    %442 = vmatpush2.msra.mxu0 %v124
    %443 = vmatprep.subr.mxu0 0.0
    %444 = vmatpush2.msra.mxu0 %v123
    %445 = vmatprep.subr.mxu0 0.0
    %446 = vmatpush2.msra.mxu0 %v122
    %447 = vmatprep.subr.mxu0 0.0
    %448 = vmatpush2.msra.mxu0 %v121
    %449 = vmatprep.mubr.f32.mxu0 %v38
    %450 = vmatmul.mubr.f32.gmra.mxu0 %v37
    %v451 = vpop.f32.mrf.mxu0
    %v452 = vadd.f32 %v382, %v451
    %v453 = vpop.f32.mrf.mxu0
    %454 = vdwg.mxu0
    %455 = vmatprep.subr.mxu0 0.0
    %456 = vmatpush1.msra.mxu0 %v152
    %457 = vmatprep.subr.mxu0 0.0
    %458 = vmatpush1.msra.mxu0 %v151
    %459 = vmatprep.subr.mxu0 0.0
    %460 = vmatpush1.msra.mxu0 %v150
    %461 = vmatprep.subr.mxu0 0.0
    %462 = vmatpush1.msra.mxu0 %v149
    %463 = vmatprep.subr.mxu0 0.0
    %464 = vmatpush1.msra.mxu0 %v148
    %465 = vmatprep.subr.mxu0 0.0
    %466 = vmatpush1.msra.mxu0 %v147
    %467 = vmatprep.subr.mxu0 0.0
    %468 = vmatpush1.msra.mxu0 %v146
    %469 = vmatprep.subr.mxu0 0.0
    %470 = vmatpush1.msra.mxu0 %v145
    %471 = vmatprep.subr.mxu0 0.0
    %472 = vmatpush1.msra.mxu0 %v144
    %473 = vmatprep.subr.mxu0 0.0
    %474 = vmatpush1.msra.mxu0 %v143
    %475 = vmatprep.subr.mxu0 0.0
    %476 = vmatpush1.msra.mxu0 %v142
    %477 = vmatprep.subr.mxu0 0.0
    %478 = vmatpush1.msra.mxu0 %v141
    %479 = vmatprep.subr.mxu0 0.0
    %480 = vmatpush1.msra.mxu0 %v140
    %481 = vmatprep.subr.mxu0 0.0
    %482 = vmatpush1.msra.mxu0 %v139
    %483 = vmatprep.subr.mxu0 0.0
    %484 = vmatpush1.msra.mxu0 %v138
    %485 = vmatprep.subr.mxu0 0.0
    %486 = vmatpush1.msra.mxu0 %v137
    %487 = vmatprep.subr.mxu0 0.0
    %488 = vmatpush2.msra.mxu0 %v168
    %489 = vmatprep.subr.mxu0 0.0
    %490 = vmatpush2.msra.mxu0 %v167
    %491 = vmatprep.subr.mxu0 0.0
    %492 = vmatpush2.msra.mxu0 %v166
    %493 = vmatprep.subr.mxu0 0.0
    %494 = vmatpush2.msra.mxu0 %v165
    %495 = vmatprep.subr.mxu0 0.0
    %496 = vmatpush2.msra.mxu0 %v164
    %497 = vmatprep.subr.mxu0 0.0
    %498 = vmatpush2.msra.mxu0 %v163
    %499 = vmatprep.subr.mxu0 0.0
    %500 = vmatpush2.msra.mxu0 %v162
    %501 = vmatprep.subr.mxu0 0.0
    %502 = vmatpush2.msra.mxu0 %v161
    %503 = vmatprep.subr.mxu0 0.0
    %504 = vmatpush2.msra.mxu0 %v160
    %505 = vmatprep.subr.mxu0 0.0
    %506 = vmatpush2.msra.mxu0 %v159
    %507 = vmatprep.subr.mxu0 0.0
    %508 = vmatpush2.msra.mxu0 %v158
    %509 = vmatprep.subr.mxu0 0.0
    %510 = vmatpush2.msra.mxu0 %v157
    %511 = vmatprep.subr.mxu0 0.0
    %512 = vmatpush2.msra.mxu0 %v156
    %513 = vmatprep.subr.mxu0 0.0
    %514 = vmatpush2.msra.mxu0 %v155
    %515 = vmatprep.subr.mxu0 0.0
    %516 = vmatpush2.msra.mxu0 %v154
    %517 = vmatprep.subr.mxu0 0.0
    %518 = vmatpush2.msra.mxu0 %v153
    %519 = vmatprep.mubr.f32.mxu0 %v40
    %520 = vmatmul.mubr.f32.gmra.mxu0 %v39
    %v521 = vpop.f32.mrf.mxu0
    %v522 = vadd.f32 %v452, %v521
    %v523 = vpop.f32.mrf.mxu0
    %524 = vdwg.mxu0
    %v525 = vlaneseq
    %v526 = vshrl.u32 %v525, 7
    %v527 = vsub.s32 0, %v526
    %v528 = vrot.slane %v32, %v527
    %v529 = vadd.f32 %v522, %v528
    %v530 = vld [vmem:[#allocation2 + $0x408] sm:$0xff]
    %v531 = vld [vmem:[#allocation2 + $0x410] sm:$0xff]
    %v532 = vld [vmem:[#allocation2 + $0x418] sm:$0xff]
    %v533 = vld [vmem:[#allocation2 + $0x420] sm:$0xff]
    %v534 = vld [vmem:[#allocation2 + $0x428] sm:$0xff]
    %v535 = vld [vmem:[#allocation2 + $0x430] sm:$0xff]
    %v536 = vld [vmem:[#allocation2 + $0x438] sm:$0xff]
    %v537 = vld [vmem:[#allocation2 + $0x440] sm:$0xff]
    %v538 = vld [vmem:[#allocation2 + $0x448] sm:$0xff]
    %v539 = vld [vmem:[#allocation2 + $0x450] sm:$0xff]
    %v540 = vld [vmem:[#allocation2 + $0x458] sm:$0xff]
    %v541 = vld [vmem:[#allocation2 + $0x460] sm:$0xff]
    %v542 = vld [vmem:[#allocation2 + $0x468] sm:$0xff]
    %v543 = vld [vmem:[#allocation2 + $0x470] sm:$0xff]
    %v544 = vld [vmem:[#allocation2 + $0x478] sm:$0xff]
    %v545 = vld [vmem:[#allocation2 + $0x480] sm:$0xff]
    %v546 = vlaneseq
    %v547 = vshrl.u32 %v546, 7
    %v548 = vsub.s32 1, %v547
    %v549 = vrot.slane %v32, %v548
    %550 = vmatprep.subr.mxu0 0.0
    %551 = vmatpush1.msra.mxu0 %v545
    %552 = vmatprep.subr.mxu0 0.0
    %553 = vmatpush1.msra.mxu0 %v544
    %554 = vmatprep.subr.mxu0 0.0
    %555 = vmatpush1.msra.mxu0 %v543
    %556 = vmatprep.subr.mxu0 0.0
    %557 = vmatpush1.msra.mxu0 %v542
    %558 = vmatprep.subr.mxu0 0.0
    %559 = vmatpush1.msra.mxu0 %v541
    %560 = vmatprep.subr.mxu0 0.0
    %561 = vmatpush1.msra.mxu0 %v540
    %562 = vmatprep.subr.mxu0 0.0
    %563 = vmatpush1.msra.mxu0 %v539
    %564 = vmatprep.subr.mxu0 0.0
    %565 = vmatpush1.msra.mxu0 %v538
    %566 = vmatprep.subr.mxu0 0.0
    %567 = vmatpush1.msra.mxu0 %v537
    %568 = vmatprep.subr.mxu0 0.0
    %569 = vmatpush1.msra.mxu0 %v536
    %570 = vmatprep.subr.mxu0 0.0
    %571 = vmatpush1.msra.mxu0 %v535
    %572 = vmatprep.subr.mxu0 0.0
    %573 = vmatpush1.msra.mxu0 %v534
    %574 = vmatprep.subr.mxu0 0.0
    %575 = vmatpush1.msra.mxu0 %v533
    %576 = vmatprep.subr.mxu0 0.0
    %577 = vmatpush1.msra.mxu0 %v532
    %578 = vmatprep.subr.mxu0 0.0
    %579 = vmatpush1.msra.mxu0 %v531
    %580 = vmatprep.subr.mxu0 0.0
    %581 = vmatpush1.msra.mxu0 %v530
    %582 = vmatprep.subr.mxu0 0.0
    %583 = vmatpush2.msra.mxu0 0.0
    %584 = vmatprep.subr.mxu0 0.0
    %585 = vmatpush2.msra.mxu0 0.0
    %586 = vmatprep.subr.mxu0 0.0
    %587 = vmatpush2.msra.mxu0 0.0
    %588 = vmatprep.subr.mxu0 0.0
    %589 = vmatpush2.msra.mxu0 0.0
    %590 = vmatprep.subr.mxu0 0.0
    %591 = vmatpush2.msra.mxu0 0.0
    %592 = vmatprep.subr.mxu0 0.0
    %593 = vmatpush2.msra.mxu0 0.0
    %594 = vmatprep.subr.mxu0 0.0
    %595 = vmatpush2.msra.mxu0 0.0
    %596 = vmatprep.subr.mxu0 0.0
    %597 = vmatpush2.msra.mxu0 0.0
    %598 = vmatprep.subr.mxu0 0.0
    %599 = vmatpush2.msra.mxu0 0.0
    %600 = vmatprep.subr.mxu0 0.0
    %601 = vmatpush2.msra.mxu0 0.0
    %602 = vmatprep.subr.mxu0 0.0
    %603 = vmatpush2.msra.mxu0 0.0
    %604 = vmatprep.subr.mxu0 0.0
    %605 = vmatpush2.msra.mxu0 0.0
    %606 = vmatprep.subr.mxu0 0.0
    %607 = vmatpush2.msra.mxu0 0.0
    %608 = vmatprep.subr.mxu0 0.0
    %609 = vmatpush2.msra.mxu0 0.0
    %610 = vmatprep.subr.mxu0 0.0
    %611 = vmatpush2.msra.mxu0 0.0
    %612 = vmatprep.subr.mxu0 0.0
    %613 = vmatpush2.msra.mxu0 0.0
    %614 = vmatprep.mubr.f32.mxu0 0.0
    %615 = vmatmul.mubr.f32.gmra.mxu0 %v529
    %v616 = vpop.f32.mrf.mxu0
    %v617 = vadd.f32 %v549, %v616
    %v618 = vpop.f32.mrf.mxu0
    %619 = vdwg.mxu0
    %v620 = vmax.f32 %v617, 0.0
    %v621 = vld [vmem:[#allocation2 + $0x488] sm:$0xff]
    %v622 = vld [vmem:[#allocation2 + $0x490] sm:$0xff]
    %v623 = vld [vmem:[#allocation2 + $0x498] sm:$0xff]
    %v624 = vld [vmem:[#allocation2 + $0x4a0] sm:$0xff]
    %v625 = vld [vmem:[#allocation2 + $0x4a8] sm:$0xff]
    %v626 = vld [vmem:[#allocation2 + $0x4b0] sm:$0xff]
    %v627 = vld [vmem:[#allocation2 + $0x4b8] sm:$0xff]
    %v628 = vld [vmem:[#allocation2 + $0x4c0] sm:$0xff]
    %v629 = vld [vmem:[#allocation2 + $0x4c8] sm:$0xff]
    %v630 = vld [vmem:[#allocation2 + $0x4d0] sm:$0xff]
    %v631 = vld [vmem:[#allocation2 + $0x4d8] sm:$0xff]
    %v632 = vld [vmem:[#allocation2 + $0x4e0] sm:$0xff]
    %v633 = vld [vmem:[#allocation2 + $0x4e8] sm:$0xff]
    %v634 = vld [vmem:[#allocation2 + $0x4f0] sm:$0xff]
    %v635 = vld [vmem:[#allocation2 + $0x4f8] sm:$0xff]
    %v636 = vld [vmem:[#allocation2 + $0x500] sm:$0xff]
    %v637 = vlaneseq
    %v638 = vshrl.u32 %v637, 7
    %v639 = vsub.s32 2, %v638
    %v640 = vrot.slane %v32, %v639
    %641 = vmatprep.subr.mxu0 0.0
    %642 = vmatpush1.msra.mxu0 %v636
    %643 = vmatprep.subr.mxu0 0.0
    %644 = vmatpush1.msra.mxu0 %v635
    %645 = vmatprep.subr.mxu0 0.0
    %646 = vmatpush1.msra.mxu0 %v634
    %647 = vmatprep.subr.mxu0 0.0
    %648 = vmatpush1.msra.mxu0 %v633
    %649 = vmatprep.subr.mxu0 0.0
    %650 = vmatpush1.msra.mxu0 %v632
    %651 = vmatprep.subr.mxu0 0.0
    %652 = vmatpush1.msra.mxu0 %v631
    %653 = vmatprep.subr.mxu0 0.0
    %654 = vmatpush1.msra.mxu0 %v630
    %655 = vmatprep.subr.mxu0 0.0
    %656 = vmatpush1.msra.mxu0 %v629
    %657 = vmatprep.subr.mxu0 0.0
    %658 = vmatpush1.msra.mxu0 %v628
    %659 = vmatprep.subr.mxu0 0.0
    %660 = vmatpush1.msra.mxu0 %v627
    %661 = vmatprep.subr.mxu0 0.0
    %662 = vmatpush1.msra.mxu0 %v626
    %663 = vmatprep.subr.mxu0 0.0
    %664 = vmatpush1.msra.mxu0 %v625
    %665 = vmatprep.subr.mxu0 0.0
    %666 = vmatpush1.msra.mxu0 %v624
    %667 = vmatprep.subr.mxu0 0.0
    %668 = vmatpush1.msra.mxu0 %v623
    %669 = vmatprep.subr.mxu0 0.0
    %670 = vmatpush1.msra.mxu0 %v622
    %671 = vmatprep.subr.mxu0 0.0
    %672 = vmatpush1.msra.mxu0 %v621
    %673 = vmatprep.subr.mxu0 0.0
    %674 = vmatpush2.msra.mxu0 0.0
    %675 = vmatprep.subr.mxu0 0.0
    %676 = vmatpush2.msra.mxu0 0.0
    %677 = vmatprep.subr.mxu0 0.0
    %678 = vmatpush2.msra.mxu0 0.0
    %679 = vmatprep.subr.mxu0 0.0
    %680 = vmatpush2.msra.mxu0 0.0
    %681 = vmatprep.subr.mxu0 0.0
    %682 = vmatpush2.msra.mxu0 0.0
    %683 = vmatprep.subr.mxu0 0.0
    %684 = vmatpush2.msra.mxu0 0.0
    %685 = vmatprep.subr.mxu0 0.0
    %686 = vmatpush2.msra.mxu0 0.0
    %687 = vmatprep.subr.mxu0 0.0
    %688 = vmatpush2.msra.mxu0 0.0
    %689 = vmatprep.subr.mxu0 0.0
    %690 = vmatpush2.msra.mxu0 0.0
    %691 = vmatprep.subr.mxu0 0.0
    %692 = vmatpush2.msra.mxu0 0.0
    %693 = vmatprep.subr.mxu0 0.0
    %694 = vmatpush2.msra.mxu0 0.0
    %695 = vmatprep.subr.mxu0 0.0
    %696 = vmatpush2.msra.mxu0 0.0
    %697 = vmatprep.subr.mxu0 0.0
    %698 = vmatpush2.msra.mxu0 0.0
    %699 = vmatprep.subr.mxu0 0.0
    %700 = vmatpush2.msra.mxu0 0.0
    %701 = vmatprep.subr.mxu0 0.0
    %702 = vmatpush2.msra.mxu0 0.0
    %703 = vmatprep.subr.mxu0 0.0
    %704 = vmatpush2.msra.mxu0 0.0
    %705 = vmatprep.mubr.f32.mxu0 0.0
    %706 = vmatmul.mubr.f32.gmra.mxu0 %v620
    %v707 = vpop.f32.mrf.mxu0
    %v708 = vadd.f32 %v640, %v707
    %v709 = vpop.f32.mrf.mxu0
    %710 = vdwg.mxu0
    %v711 = vmax.f32 %v708, 0.0
    %v712 = vld [vmem:[#allocation2 + $0x508] sm:$0xff]
    %v713 = vld [vmem:[#allocation2 + $0x510] sm:$0xff]
    %v714 = vld [vmem:[#allocation2 + $0x518] sm:$0xff]
    %v715 = vld [vmem:[#allocation2 + $0x520] sm:$0xff]
    %v716 = vld [vmem:[#allocation2 + $0x528] sm:$0xff]
    %v717 = vld [vmem:[#allocation2 + $0x530] sm:$0xff]
    %v718 = vld [vmem:[#allocation2 + $0x538] sm:$0xff]
    %v719 = vld [vmem:[#allocation2 + $0x540] sm:$0xff]
    %v720 = vld [vmem:[#allocation2 + $0x548] sm:$0xff]
    %v721 = vld [vmem:[#allocation2 + $0x550] sm:$0xff]
    %v722 = vld [vmem:[#allocation2 + $0x558] sm:$0xff]
    %v723 = vld [vmem:[#allocation2 + $0x560] sm:$0xff]
    %v724 = vld [vmem:[#allocation2 + $0x568] sm:$0xff]
    %v725 = vld [vmem:[#allocation2 + $0x570] sm:$0xff]
    %v726 = vld [vmem:[#allocation2 + $0x578] sm:$0xff]
    %v727 = vld [vmem:[#allocation2 + $0x580] sm:$0xff]
    %v728 = vlaneseq
    %v729 = vshrl.u32 %v728, 7
    %v730 = vsub.s32 3, %v729
    %v731 = vrot.slane %v32, %v730
    %732 = vmatprep.subr.mxu0 0.0
    %733 = vmatpush1.msra.mxu0 %v727
    %734 = vmatprep.subr.mxu0 0.0
    %735 = vmatpush1.msra.mxu0 %v726
    %736 = vmatprep.subr.mxu0 0.0
    %737 = vmatpush1.msra.mxu0 %v725
    %738 = vmatprep.subr.mxu0 0.0
    %739 = vmatpush1.msra.mxu0 %v724
    %740 = vmatprep.subr.mxu0 0.0
    %741 = vmatpush1.msra.mxu0 %v723
    %742 = vmatprep.subr.mxu0 0.0
    %743 = vmatpush1.msra.mxu0 %v722
    %744 = vmatprep.subr.mxu0 0.0
    %745 = vmatpush1.msra.mxu0 %v721
    %746 = vmatprep.subr.mxu0 0.0
    %747 = vmatpush1.msra.mxu0 %v720
    %748 = vmatprep.subr.mxu0 0.0
    %749 = vmatpush1.msra.mxu0 %v719
    %750 = vmatprep.subr.mxu0 0.0
    %751 = vmatpush1.msra.mxu0 %v718
    %752 = vmatprep.subr.mxu0 0.0
    %753 = vmatpush1.msra.mxu0 %v717
    %754 = vmatprep.subr.mxu0 0.0
    %755 = vmatpush1.msra.mxu0 %v716
    %756 = vmatprep.subr.mxu0 0.0
    %757 = vmatpush1.msra.mxu0 %v715
    %758 = vmatprep.subr.mxu0 0.0
    %759 = vmatpush1.msra.mxu0 %v714
    %760 = vmatprep.subr.mxu0 0.0
    %761 = vmatpush1.msra.mxu0 %v713
    %762 = vmatprep.subr.mxu0 0.0
    %763 = vmatpush1.msra.mxu0 %v712
    %764 = vmatprep.subr.mxu0 0.0
    %765 = vmatpush2.msra.mxu0 0.0
    %766 = vmatprep.subr.mxu0 0.0
    %767 = vmatpush2.msra.mxu0 0.0
    %768 = vmatprep.subr.mxu0 0.0
    %769 = vmatpush2.msra.mxu0 0.0
    %770 = vmatprep.subr.mxu0 0.0
    %771 = vmatpush2.msra.mxu0 0.0
    %772 = vmatprep.subr.mxu0 0.0
    %773 = vmatpush2.msra.mxu0 0.0
    %774 = vmatprep.subr.mxu0 0.0
    %775 = vmatpush2.msra.mxu0 0.0
    %776 = vmatprep.subr.mxu0 0.0
    %777 = vmatpush2.msra.mxu0 0.0
    %778 = vmatprep.subr.mxu0 0.0
    %779 = vmatpush2.msra.mxu0 0.0
    %780 = vmatprep.subr.mxu0 0.0
    %781 = vmatpush2.msra.mxu0 0.0
    %782 = vmatprep.subr.mxu0 0.0
    %783 = vmatpush2.msra.mxu0 0.0
    %784 = vmatprep.subr.mxu0 0.0
    %785 = vmatpush2.msra.mxu0 0.0
    %786 = vmatprep.subr.mxu0 0.0
    %787 = vmatpush2.msra.mxu0 0.0
    %788 = vmatprep.subr.mxu0 0.0
    %789 = vmatpush2.msra.mxu0 0.0
    %790 = vmatprep.subr.mxu0 0.0
    %791 = vmatpush2.msra.mxu0 0.0
    %792 = vmatprep.subr.mxu0 0.0
    %793 = vmatpush2.msra.mxu0 0.0
    %794 = vmatprep.subr.mxu0 0.0
    %795 = vmatpush2.msra.mxu0 0.0
    %796 = vmatprep.mubr.f32.mxu0 0.0
    %797 = vmatmul.mubr.f32.gmra.mxu0 %v711
    %v798 = vpop.f32.mrf.mxu0
    %v799 = vadd.f32 %v731, %v798
    %v800 = vpop.f32.mrf.mxu0
    %801 = vdwg.mxu0
    %v802 = vmax.f32 %v799, 0.0
    %803 = vst [vmem:[#allocation5] sm:$0xff] %v802
    // Predicated region
    $region22: #{vrd_forward.1} parent=1 // pred_check
      _
    $region23: #{vrd_forward.1} parent=1 // pred_check_branch
      %805 = sbr.rel (0) target = $region25
    $region24: #{vrd_forward.1} parent=1 // pred_region
      %s807 = ssub.s32 128, 128
      %808 = vsyncadd [#allocation4], %s807
      %s810 = sshll.u32 [#allocation5], 4
      %s811 = int_to_ptr.vmem [resolvable:$true] %s810
      %813 = dma.vmem_to_hbm [thread:$0]  %s811, 128, %s4, [#allocation4]
    $region25: #{vrd_forward.1} parent=1 // pred_fallthru
      _
    // Predicated region
    $region26: #{vrd_forward.1} parent=1 // pred_check
      _
    $region27: #{vrd_forward.1} parent=1 // pred_check_branch
      %815 = sbr.rel (0) target = $region29
    $region28: #{vrd_forward.1} parent=1 // pred_region
      %816 = dma.done [#allocation4], 128
    $region29: #{vrd_forward.1} parent=1 // pred_fallthru
      _
    %817 = vsyncpa [#allocation3], 1
    %818 = vsyncpa [#allocation4], 1

</llo_original>
